<compile_context>
chip_gen: v7x
topology: tpu7x:2x2x1
jax: 0.10.0
libtpu: 0.0.40
codegen_flags: <defaults>
</compile_context>

<pallas_src>
import functools

import jax
import jax.numpy as jnp
from jax import lax
from jax.experimental import pallas as pl
from jax.experimental.pallas import tpu as pltpu


def _round_up(a, m):
    return ((a + m - 1) // m) * m


def _graphconv_kernel(*refs, att, add_self, use_bias, normalize, xw_first,
                      block_rows, num_row_tiles, compute_dtype):
    idx = 0
    x_ref = refs[idx]; idx += 1            # (1, Np, Din)   resident per batch
    adj_ref = refs[idx]; idx += 1          # (1, TN, Np)    adjacency row tile
    w_ref = refs[idx]; idx += 1            # (Din, Dout_p)
    sw_ref = aw_ref = b_ref = None
    if add_self:
        sw_ref = refs[idx]; idx += 1       # (Din, Dout_p)
    if att:
        aw_ref = refs[idx]; idx += 1       # (Din, Din)
    if use_bias:
        b_ref = refs[idx]; idx += 1        # (1, Dout_p)
    y_ref = refs[idx]; idx += 1            # (1, TN, Dout_p)
    adj_out_ref = refs[idx] if att else None   # (1, TN, Np)

    def mx(a):
        # Optional MXU-feed cast; accumulation stays f32 via preferred_element_type.
        return a if compute_dtype is None else a.astype(compute_dtype)

    x = x_ref[0]                            # (Np, Din) full node features
    adj = adj_ref[0]                        # (TN, Np)

    # Row tile of x, only materialized when actually needed.
    if att or add_self:
        if num_row_tiles == 1:
            x_tile = x
        else:
            row_start = pl.multiple_of(pl.program_id(1) * block_rows, block_rows)
            x_tile = x_ref[0, pl.ds(row_start, block_rows), :]
    else:
        x_tile = None

    if att:
        aw = mx(aw_ref[...])
        x_att_full = jnp.dot(mx(x), aw, preferred_element_type=jnp.float32)
        if num_row_tiles == 1:
            x_att_tile = x_att_full
        else:
            x_att_tile = jnp.dot(mx(x_tile), aw, preferred_element_type=jnp.float32)
        # Contract last axes of both operands directly — no explicit transpose.
        att_m = lax.dot_general(
            mx(x_att_tile), mx(x_att_full),
            dimension_numbers=(((1,), (1,)), ((), ())),
            preferred_element_type=jnp.float32)
        adj = adj.astype(jnp.float32) * att_m          # (TN, Np), f32
        adj_out_ref[0] = adj.astype(adj_out_ref.dtype)

    if xw_first:
        xw = jnp.dot(mx(x), mx(w_ref[...]), preferred_element_type=jnp.float32)
        y = jnp.dot(mx(adj), mx(xw), preferred_element_type=jnp.float32)
    else:
        ax = jnp.dot(mx(adj), mx(x), preferred_element_type=jnp.float32)
        y = jnp.dot(mx(ax), mx(w_ref[...]), preferred_element_type=jnp.float32)

    if add_self:
        y = y + jnp.dot(mx(x_tile), mx(sw_ref[...]), preferred_element_type=jnp.float32)
    if use_bias:
        y = y + b_ref[...].astype(jnp.float32)
    if normalize:
        # torch F.normalize(p=2, dim=2): y / max(||y||, 1e-12)  ==  y * rsqrt(max(ss, 1e-24))
        ss = jnp.sum(y * y, axis=-1, keepdims=True)
        y = y * lax.rsqrt(jnp.maximum(ss, 1e-24))
    y_ref[0] = y.astype(y_ref.dtype)


def graph_conv(x, adj, weight, self_weight=None, att_weight=None, bias=None,
               normalize_embedding=False, block_rows=None, compute_dtype=None):
    """Pallas implementation of GraphConv.forward. Returns (y, adj_out)."""
    # TODO(synk): train-mode nn.Dropout not implemented; eval semantics assumed.
    adj_in = adj
    B, N, Din = x.shape
    Dout = weight.shape[1]
    add_self = self_weight is not None
    att = att_weight is not None
    use_bias = bias is not None

    # ---- tiling / padding choices -----------------------------------------
    if block_rows is None:
        block_rows = 256                        # keeps double-buffering alive on v5e/v7x
    TN = min(_round_up(block_rows, 8), N)
    if TN >= N:
        TN, N_pad = N, N
    else:
        N_pad = _round_up(N, TN)
    num_row_tiles = N_pad // TN
    Dout_pad = _round_up(Dout, 128)             # lane-dense output stores

    if N_pad != N:
        x = jnp.pad(x, ((0, 0), (0, N_pad - N), (0, 0)))
        adj = jnp.pad(adj, ((0, 0), (0, N_pad - N), (0, N_pad - N)))
    if Dout_pad != Dout:
        weight = jnp.pad(weight, ((0, 0), (0, Dout_pad - Dout)))
        if add_self:
            self_weight = jnp.pad(self_weight, ((0, 0), (0, Dout_pad - Dout)))
        if use_bias:
            bias = jnp.pad(bias, (0, Dout_pad - Dout))

    # Contraction order: put the cheaper feature dim in the N^2 matmul.
    cost_adj_first = TN * N_pad * Din + TN * Din * Dout_pad
    cost_xw_first = N_pad * Din * Dout_pad + TN * N_pad * Dout_pad
    xw_first = cost_xw_first < cost_adj_first

    inputs = [x, adj, weight]
    in_specs = [
        pl.BlockSpec((1, N_pad, Din), lambda b, r: (b, 0, 0)),    # x resident per batch
        pl.BlockSpec((1, TN, N_pad), lambda b, r: (b, r, 0)),     # adjacency row tile
        pl.BlockSpec((Din, Dout_pad), lambda b, r: (0, 0)),
    ]
    if add_self:
        inputs.append(self_weight)
        in_specs.append(pl.BlockSpec((Din, Dout_pad), lambda b, r: (0, 0)))
    if att:
        inputs.append(att_weight)
        in_specs.append(pl.BlockSpec((Din, Din), lambda b, r: (0, 0)))
    if use_bias:
        inputs.append(bias.reshape(1, Dout_pad))
        in_specs.append(pl.BlockSpec((1, Dout_pad), lambda b, r: (0, 0)))

    y_struct = jax.ShapeDtypeStruct((B, N_pad, Dout_pad), x.dtype)
    y_spec = pl.BlockSpec((1, TN, Dout_pad), lambda b, r: (b, r, 0))
    if att:
        out_shape = (y_struct, jax.ShapeDtypeStruct((B, N_pad, N_pad), adj.dtype))
        out_specs = (y_spec, pl.BlockSpec((1, TN, N_pad), lambda b, r: (b, r, 0)))
    else:
        out_shape = y_struct
        out_specs = y_spec

    # ---- advisory cost estimate -------------------------------------------
    per_step = 2 * (cost_xw_first if xw_first else cost_adj_first)
    if att:
        per_step += 2 * (N_pad * Din * Din
                         + (0 if num_row_tiles == 1 else TN * Din * Din)
                         + TN * N_pad * Din)
    if add_self:
        per_step += 2 * TN * Din * Dout_pad
    flops = int(B * num_row_tiles * per_step)
    transcendentals = int(B * N_pad) if normalize_embedding else 0
    bytes_accessed = int(
        B * N_pad * Din * x.dtype.itemsize
        + B * N_pad * N_pad * adj.dtype.itemsize * (2 if att else 1)
        + B * N_pad * Dout_pad * x.dtype.itemsize
        + Din * Dout_pad * weight.dtype.itemsize)
    cost = pl.CostEstimate(flops=flops, transcendentals=transcendentals,
                           bytes_accessed=bytes_accessed)

    # VMEM budget: resident x + double-buffered adj (+adj_out) + y + weights.
    vmem_est = 4 * (2 * N_pad * Din
                    + 2 * TN * N_pad * (2 if att else 1)
                    + 2 * TN * Dout_pad
                    + 2 * (Din * Dout_pad * (2 if add_self else 1)
                           + (Din * Din if att else 0) + Dout_pad))
    vmem_limit = min(max(32 * 1024 * 1024, int(vmem_est * 3 // 2)), 128 * 1024 * 1024)

    kernel = functools.partial(
        _graphconv_kernel,
        att=att, add_self=add_self, use_bias=use_bias,
        normalize=normalize_embedding, xw_first=xw_first,
        block_rows=TN, num_row_tiles=num_row_tiles, compute_dtype=compute_dtype)

    result = pl.pallas_call(
        kernel,
        out_shape=out_shape,
        grid_spec=pltpu.PrefetchScalarGridSpec(
            num_scalar_prefetch=0,
            grid=(B, num_row_tiles),
            in_specs=in_specs,
            out_specs=out_specs),
        compiler_params=pltpu.CompilerParams(
            dimension_semantics=("parallel", "parallel"),
            vmem_limit_bytes=vmem_limit),
        cost_estimate=cost,
    )(*inputs)

    if att:
        y_pad, adj_out_pad = result
        adj_ret = adj_out_pad[:, :N, :N] if N_pad != N else adj_out_pad
    else:
        y_pad = result
        adj_ret = adj_in                       # att=False: adj passes through, no copy
    y = y_pad[:, :N, :Dout] if (N_pad != N or Dout_pad != Dout) else y_pad
    return y, adj_ret


def _ref(x, adj, weight, self_weight=None, att_weight=None, bias=None,
         normalize_embedding=False):
    if att_weight is not None:
        x_att = jnp.einsum('bnd,de->bne', x, att_weight)
        att_m = jnp.einsum('bnd,bmd->bnm', x_att, x_att)
        adj = adj * att_m
    y = jnp.einsum('bnm,bmd->bnd', adj, x)
    y = jnp.einsum('bnd,de->bne', y, weight)
    if self_weight is not None:
        y = y + jnp.einsum('bnd,de->bne', x, self_weight)
    if bias is not None:
        y = y + bias
    if normalize_embedding:
        n = jnp.sqrt(jnp.sum(y * y, axis=-1, keepdims=True))
        y = y / jnp.maximum(n, 1e-12)
    return y, adj


if __name__ == "__main__":
    key = jax.random.PRNGKey(0)
    B, N, Din, Dout = 2, 16, 32, 32

    kx, ka, kw, ksw, kaw, kb = jax.random.split(key, 6)
    x = jax.random.normal(kx, (B, N, Din), dtype=jnp.float32)
    adj = jax.random.uniform(ka, (B, N, N), dtype=jnp.float32)
    weight = jax.random.normal(kw, (Din, Dout), dtype=jnp.float32) * 0.1
    self_weight = jax.random.normal(ksw, (Din, Dout), dtype=jnp.float32) * 0.1
    att_weight = jax.random.normal(kaw, (Din, Din), dtype=jnp.float32) * 0.1
    bias = jax.random.normal(kb, (Dout,), dtype=jnp.float32) * 0.1

    # 1) Default GraphConv config (bias only): adj is passed through untouched.
    y1, a1 = graph_conv(x, adj, weight, bias=bias)
    y1r, a1r = _ref(x, adj, weight, bias=bias)
    jax.block_until_ready((y1, a1))
    assert y1.shape == (B, N, Dout) and a1.shape == (B, N, N)
    assert float(jnp.max(jnp.abs(y1 - y1r))) < 2e-3
    assert float(jnp.max(jnp.abs(a1 - a1r))) < 1e-6

    # 2) Full-featured config (attention, self loop, L2 normalize), row-tiled grid.
    y2, a2 = graph_conv(x, adj, weight, self_weight=self_weight,
                        att_weight=att_weight, bias=bias,
                        normalize_embedding=True, block_rows=8)
    y2r, a2r = _ref(x, adj, weight, self_weight, att_weight, bias, True)
    jax.block_until_ready((y2, a2))
    assert y2.shape == (B, N, Dout) and a2.shape == (B, N, N)
    assert float(jnp.max(jnp.abs(y2 - y2r))) < 2e-3
    assert float(jnp.max(jnp.abs(a2 - a2r))) < 2e-3

    # 3) bf16 MXU feed (f32 accumulation), row-tiled, add_self path.
    y3, a3 = graph_conv(x, adj, weight, self_weight=self_weight, bias=bias,
                        block_rows=8, compute_dtype=jnp.bfloat16)
    jax.block_until_ready((y3, a3))
    assert y3.shape == (B, N, Dout) and a3.shape == (B, N, N)

    print("KERNEL_OK")
</pallas_src>

<mosaic_0001>
module attributes {stable_mosaic.version = 11 : i64} {
  func.func @_graphconv_kernel(%arg0: i32, %arg1: i32, %arg2: memref<1x16x32xf32, #tpu.memory_space<vmem>>, %arg3: memref<1x16x16xf32, #tpu.memory_space<vmem>>, %arg4: memref<32x128xf32, #tpu.memory_space<vmem>>, %arg5: memref<1x128xf32, #tpu.memory_space<vmem>>, %arg6: memref<1x16x128xf32, #tpu.memory_space<vmem>>) attributes {dimension_semantics = [#tpu.dimension_semantics<parallel>, #tpu.dimension_semantics<parallel>], iteration_bounds = array<i64: 2, 1>, scalar_prefetch = 0 : i64, scratch_operands = 0 : i64, tpu.core_type = #tpu.core_type<tc>, window_params = [{transform_indices = @transform_0, window_bounds = array<i64: 1, 16, 32>}, {transform_indices = @transform_1, window_bounds = array<i64: 1, 16, 16>}, {pipeline_mode = #tpu.pipeline_mode<synchronous>, transform_indices = @transform_2, window_bounds = array<i64: 32, 128>}, {pipeline_mode = #tpu.pipeline_mode<synchronous>, transform_indices = @transform_3, window_bounds = array<i64: 1, 128>}, {transform_indices = @transform_4, window_bounds = array<i64: 1, 16, 128>}]} {
    %c0 = arith.constant 0 : index
    %c0_0 = arith.constant 0 : index
    %c0_1 = arith.constant 0 : index
    %0 = vector.load %arg2[%c0, %c0_0, %c0_1] : memref<1x16x32xf32, #tpu.memory_space<vmem>>, vector<1x16x32xf32>
    %1 = vector.shape_cast %0 : vector<1x16x32xf32> to vector<16x32xf32>
    %c0_2 = arith.constant 0 : index
    %c0_3 = arith.constant 0 : index
    %c0_4 = arith.constant 0 : index
    %2 = vector.load %arg3[%c0_2, %c0_3, %c0_4] : memref<1x16x16xf32, #tpu.memory_space<vmem>>, vector<1x16x16xf32>
    %3 = vector.shape_cast %2 : vector<1x16x16xf32> to vector<16x16xf32>
    %cst = arith.constant dense<0.000000e+00> : vector<16x32xf32>
    %4 = tpu.matmul %3, %1, %cst {dimension_numbers = #tpu.dot_dimension_numbers<[1], [0], [0], [1], [0, 0, 1, 1], [], []>} : vector<16x16xf32>, vector<16x32xf32>, vector<16x32xf32> -> vector<16x32xf32>
    %c0_5 = arith.constant 0 : index
    %c0_6 = arith.constant 0 : index
    %5 = vector.load %arg4[%c0_5, %c0_6] : memref<32x128xf32, #tpu.memory_space<vmem>>, vector<32x128xf32>
    %cst_7 = arith.constant dense<0.000000e+00> : vector<16x128xf32>
    %6 = tpu.matmul %4, %5, %cst_7 {dimension_numbers = #tpu.dot_dimension_numbers<[1], [0], [0], [1], [0, 0, 1, 1], [], []>} : vector<16x32xf32>, vector<32x128xf32>, vector<16x128xf32> -> vector<16x128xf32>
    %c0_8 = arith.constant 0 : index
    %c0_9 = arith.constant 0 : index
    %7 = vector.load %arg5[%c0_8, %c0_9] : memref<1x128xf32, #tpu.memory_space<vmem>>, vector<1x128xf32>
    %8 = vector.broadcast %7 : vector<1x128xf32> to vector<16x128xf32>
    %9 = arith.addf %6, %8 : vector<16x128xf32>
    %c0_10 = arith.constant 0 : index
    %c0_11 = arith.constant 0 : index
    %c0_12 = arith.constant 0 : index
    %10 = vector.load %arg6[%c0_10, %c0_11, %c0_12] : memref<1x16x128xf32, #tpu.memory_space<vmem>>, vector<1x16x128xf32>
    %11 = vector.shape_cast %10 : vector<1x16x128xf32> to vector<16x128xf32>
    %12 = vector.shape_cast %9 : vector<16x128xf32> to vector<1x16x128xf32>
    tpu.vector_store %arg6[%c0_10, %c0_11, %c0_12], %12 {strides = array<i32>} : memref<1x16x128xf32, #tpu.memory_space<vmem>>, vector<1x16x128xf32>,
    return
  }
  func.func @transform_0(%arg0: i32, %arg1: i32) -> (i32, i32, i32) {
    %c0_i32 = arith.constant 0 : i32
    %c0_i32_0 = arith.constant 0 : i32
    %c0_i32_1 = arith.constant 0 : i32
    return %arg0, %c0_i32, %c0_i32_0 : i32, i32, i32
  }
  func.func @transform_1(%arg0: i32, %arg1: i32) -> (i32, i32, i32) {
    %c0_i32 = arith.constant 0 : i32
    %c0_i32_0 = arith.constant 0 : i32
    return %arg0, %arg1, %c0_i32 : i32, i32, i32
  }
  func.func @transform_2(%arg0: i32, %arg1: i32) -> (i32, i32) {
    %c0_i32 = arith.constant 0 : i32
    %c0_i32_0 = arith.constant 0 : i32
    %c0_i32_1 = arith.constant 0 : i32
    return %c0_i32, %c0_i32_0 : i32, i32
  }
  func.func @transform_3(%arg0: i32, %arg1: i32) -> (i32, i32) {
    %c0_i32 = arith.constant 0 : i32
    %c0_i32_0 = arith.constant 0 : i32
    %c0_i32_1 = arith.constant 0 : i32
    return %c0_i32, %c0_i32_0 : i32, i32
  }
  func.func @transform_4(%arg0: i32, %arg1: i32) -> (i32, i32, i32) {
    %c0_i32 = arith.constant 0 : i32
    %c0_i32_0 = arith.constant 0 : i32
    return %arg0, %arg1, %c0_i32 : i32, i32, i32
  }
}

</mosaic_0001>

<llo_original>
// kernel: tpu_custom_call.1
$region0: #{tpu_custom_call.1}
  #allocation0 [shape = 'u32[]', space=smem, size = 0x4, offset = 0x4, fixed_abs, tag = 'smem constant byte address 0x4 - core index']
  #allocation1 [shape = 'u32[144,128]{1,0:T(1,128)}', space=vmem, size = 0x12000, scoped, tag = 'internal scratch']
  %s0 = inlined_call_operand.hbm [shape: f32[2,16,32], index: 0, kind: input, shape index: {}]
  %s1 = inlined_call_operand.hbm [shape: f32[2,16,16], index: 1, kind: input, shape index: {}]
  %s2 = inlined_call_operand.hbm [shape: f32[32,128], index: 2, kind: input, shape index: {}]
  %s3 = inlined_call_operand.vmem [shape: f32[1,128], index: 3, kind: input, shape index: {}]
  %s4 = inlined_call_operand.hbm [shape: f32[2,16,128], index: 4, kind: output, shape index: {}]
  %s5 = sld [smem:[#allocation0]]
  $region61: #{tpu_custom_call.1} parent=0
    _
  %s7 = ssub.s32 1, %s5
  %s8 = scalar_select 0, %s7, %s5
  $region1: #{tpu_custom_call.1} parent=0
    #allocation2 [shape = 'u8[16384]{0}', space=vmem, size = 0x4000, scoped, tag = 'input window, operand 0']
    #allocation3 [shape = 's32[2]{0}', space=sflag, size = 0x8, scoped, tag = 'scoped memory for tpu_custom_call.1']
    #allocation4 [shape = 's32[2]{0}', space=sflag, size = 0x8, scoped, tag = 'scoped memory for tpu_custom_call.1']
    #allocation5 [shape = 'u8[16384]{0}', space=vmem, size = 0x4000, scoped, tag = 'input window, operand 1']
    #allocation6 [shape = 's32[2]{0}', space=sflag, size = 0x8, scoped, tag = 'scoped memory for tpu_custom_call.1']
    #allocation7 [shape = 'u8[16384]{0}', space=vmem, size = 0x4000, scoped, tag = 'input window, operand 2, single buffered']
    #allocation8 [shape = 'u8[16384]{0}', space=vmem, size = 0x4000, scoped, tag = 'output window, operand 0']
    %9 = vsyncpa [#allocation3], 0
    %s10 = scalar_lea.sflag [#allocation3], 1
    %11 = vsyncpa %s10, 0
    %12 = vsyncpa [#allocation6], 0
    %s13 = scalar_lea.sflag [#allocation6], 1
    %14 = vsyncpa %s13, 0
    %15 = vsyncpa [#allocation4], 0
    %s16 = scalar_lea.sflag [#allocation4], 1
    %17 = vsyncpa %s16, 0
    loop: start=0, step=1, limit=4
    $region2: #{tpu_custom_call.1} parent=1 // loop_pre_header
      _
    $region3: #{tpu_custom_call.1} parent=1 // loop_header
      %s19 = sphi 0, %s23
      %p20 = scmp.ge.s32.totalorder %s19, 4
      %s26 = sphi 0, %s38
      %s27 = sphi 0, %s34
      %s28 = sphi 0, %s26
      %s29 = sphi 0, %s27
      %s30 = sphi 0, %s28
      %s31 = sphi 0, %s29
      %s41 = sphi 0, %s43
      %s44 = sphi 0, %s41
      %s45 = sphi 0, %s44
      %s61 = sphi 0, %s45
      %s69 = sphi 0, %s71
      %s72 = sphi 0, %s69
      %s73 = sphi 0, %s72
      %s89 = sphi 0, %s73
      %s93 = sphi 0, %s93
      %s95 = sphi 0, %s93
      %s96 = sphi 0, %s95
      %s110 = sphi 0, %s96
      %s114 = sphi 0, %s114
      %s116 = sphi 0, %s114
      %s117 = sphi 0, %s116
      %s131 = sphi 0, %s117
      %s139 = sphi 0, %s141
      %s142 = sphi 0, %s139
      %s143 = sphi 0, %s142
      %s159 = sphi 0, %s143
    $region4: #{tpu_custom_call.1} parent=1 // loop_header_branch
      %22 = sbr.rel (%p20) target = $region8
    $region5: #{tpu_custom_call.1} parent=1 // loop_body
      %s24 = ssub.s32 %s19, 1
      %s25 = ssub.s32 %s19, 2
      %s32 = sadd.s32 1, %s27
      %p33 = scmp.ge.s32.totalorder %s32, 1
      %s34 = scalar_select %p33, 0, %s32
      %s35 = sadd.s32 1, %s26
      %s36 = scalar_select %p33, %s35, %s26
      %p37 = scmp.ge.s32.totalorder %s36, 2
      %s38 = scalar_select %p37, 0, %s36
      %s39 = ssub.s32 %s26, %s38
      %p40 = scmp.eq.s32.totalorder %s39, 0
      %s42 = sadd.s32 %s41, 1
      %s43 = scalar_select %p40, %s41, %s42
      %p46 = pneg %p40
      %p47 = scmp.eq.s32.totalorder %s19, 1
      %p48 = por %p46, %p47
      %p49 = scmp.ne.s32.totalorder %s41, %s44
      %p50 = scmp.eq.s32.totalorder %s19, 0
      %p51 = por %p49, %p50
      %p52 = scmp.ne.s32.totalorder %s41, %s44
      %p53 = scmp.eq.s32.totalorder %s24, 1
      %p54 = por %p52, %p53
      %p55 = scmp.ne.s32.totalorder %s44, %s45
      %p56 = scmp.eq.s32.totalorder %s24, 0
      %p57 = por %p55, %p56
      %p58 = scmp.ne.s32.totalorder %s44, %s45
      %p59 = scmp.eq.s32.totalorder %s25, 1
      %p60 = por %p58, %p59
      %p62 = scmp.ne.s32.totalorder %s45, %s61
      %p63 = scmp.eq.s32.totalorder %s25, 0
      %p64 = por %p62, %p63
      %s65 = ssub.s32 %s26, %s38
      %s66 = ssub.s32 %s27, %s34
      %s67 = sor.u32 %s65, %s66
      %p68 = scmp.eq.s32.totalorder %s67, 0
      %s70 = sadd.s32 %s69, 1
      %s71 = scalar_select %p68, %s69, %s70
      %p74 = pneg %p68
      %p75 = scmp.eq.s32.totalorder %s19, 1
      %p76 = por %p74, %p75
      %p77 = scmp.ne.s32.totalorder %s69, %s72
      %p78 = scmp.eq.s32.totalorder %s19, 0
      %p79 = por %p77, %p78
      %p80 = scmp.ne.s32.totalorder %s69, %s72
      %p81 = scmp.eq.s32.totalorder %s24, 1
      %p82 = por %p80, %p81
      %p83 = scmp.ne.s32.totalorder %s72, %s73
      %p84 = scmp.eq.s32.totalorder %s24, 0
      %p85 = por %p83, %p84
      %p86 = scmp.ne.s32.totalorder %s72, %s73
      %p87 = scmp.eq.s32.totalorder %s25, 1
      %p88 = por %p86, %p87
      %p90 = scmp.ne.s32.totalorder %s73, %s89
      %p91 = scmp.eq.s32.totalorder %s25, 0
      %p92 = por %p90, %p91
      %s94 = sadd.s32 %s93, 1
      %p97 = scmp.eq.s32.totalorder %s19, 1
      %p98 = scmp.ne.s32.totalorder %s93, %s95
      %p99 = scmp.eq.s32.totalorder %s19, 0
      %p100 = por %p98, %p99
      %p101 = scmp.ne.s32.totalorder %s93, %s95
      %p102 = scmp.eq.s32.totalorder %s24, 1
      %p103 = por %p101, %p102
      %p104 = scmp.ne.s32.totalorder %s95, %s96
      %p105 = scmp.eq.s32.totalorder %s24, 0
      %p106 = por %p104, %p105
      %p107 = scmp.ne.s32.totalorder %s95, %s96
      %p108 = scmp.eq.s32.totalorder %s25, 1
      %p109 = por %p107, %p108
      %p111 = scmp.ne.s32.totalorder %s96, %s110
      %p112 = scmp.eq.s32.totalorder %s25, 0
      %p113 = por %p111, %p112
      %s115 = sadd.s32 %s114, 1
      %p118 = scmp.eq.s32.totalorder %s19, 1
      %p119 = scmp.ne.s32.totalorder %s114, %s116
      %p120 = scmp.eq.s32.totalorder %s19, 0
      %p121 = por %p119, %p120
      %p122 = scmp.ne.s32.totalorder %s114, %s116
      %p123 = scmp.eq.s32.totalorder %s24, 1
      %p124 = por %p122, %p123
      %p125 = scmp.ne.s32.totalorder %s116, %s117
      %p126 = scmp.eq.s32.totalorder %s24, 0
      %p127 = por %p125, %p126
      %p128 = scmp.ne.s32.totalorder %s116, %s117
      %p129 = scmp.eq.s32.totalorder %s25, 1
      %p130 = por %p128, %p129
      %p132 = scmp.ne.s32.totalorder %s117, %s131
      %p133 = scmp.eq.s32.totalorder %s25, 0
      %p134 = por %p132, %p133
      %s135 = ssub.s32 %s26, %s38
      %s136 = ssub.s32 %s27, %s34
      %s137 = sor.u32 %s135, %s136
      %p138 = scmp.eq.s32.totalorder %s137, 0
      %s140 = sadd.s32 %s139, 1
      %s141 = scalar_select %p138, %s139, %s140
      %p144 = pneg %p138
      %p145 = scmp.eq.s32.totalorder %s19, 1
      %p146 = por %p144, %p145
      %p147 = scmp.ne.s32.totalorder %s139, %s142
      %p148 = scmp.eq.s32.totalorder %s19, 0
      %p149 = por %p147, %p148
      %p150 = scmp.ne.s32.totalorder %s139, %s142
      %p151 = scmp.eq.s32.totalorder %s24, 1
      %p152 = por %p150, %p151
      %p153 = scmp.ne.s32.totalorder %s142, %s143
      %p154 = scmp.eq.s32.totalorder %s24, 0
      %p155 = por %p153, %p154
      %p156 = scmp.ne.s32.totalorder %s142, %s143
      %p157 = scmp.eq.s32.totalorder %s25, 1
      %p158 = por %p156, %p157
      %p160 = scmp.ne.s32.totalorder %s143, %s159
      %p161 = scmp.eq.s32.totalorder %s25, 0
      %p162 = por %p160, %p161
      %p163 = scmp.le.s32.totalorder 1, %s19
      %p164 = scmp.lt.s32.totalorder %s19, 3
      %p165 = pnand %p163, %p164
      %p166 = pneg %p165
      // Predicated region
      $region9: #{tpu_custom_call.1} parent=5 // pred_check
        _
      $region10: #{tpu_custom_call.1} parent=5 // pred_check_branch
        %168 = sbr.rel (%p165) target = $region12
      $region11: #{tpu_custom_call.1} parent=5 // pred_region
        %s169 = ssub.s32 %s19, 1
        // Predicated region
        $region13: #{tpu_custom_call.1} parent=11 // pred_check
          %p170 = pneg %p106
        $region14: #{tpu_custom_call.1} parent=11 // pred_check_branch
          %172 = sbr.rel (%p170) target = $region16
        $region15: #{tpu_custom_call.1} parent=11 // pred_region
          %s174 = ssub.s32 512, 512
          %175 = vsyncadd [#allocation6], %s174
          %s176 = sshll.u32 [#allocation7], 4
          %s177 = int_to_ptr.vmem [resolvable:$true] %s176
          %182 = dma.hbm_to_vmem [thread:$0]  %s2, 512, %s177, [#allocation6], 128, 128, 8
        $region16: #{tpu_custom_call.1} parent=11 // pred_fallthru
          _
        // Predicated region
        $region17: #{tpu_custom_call.1} parent=11 // pred_check
          %p183 = pneg %p127
        $region18: #{tpu_custom_call.1} parent=11 // pred_check_branch
          %185 = sbr.rel (%p183) target = $region20
        $region19: #{tpu_custom_call.1} parent=11 // pred_region
          _
        $region20: #{tpu_custom_call.1} parent=11 // pred_fallthru
          _
      $region12: #{tpu_custom_call.1} parent=5 // pred_fallthru
        _
      %p186 = scmp.lt.s32.totalorder %s19, 2
      // Predicated region
      $region21: #{tpu_custom_call.1} parent=5 // pred_check
        %p187 = pneg %p186
      $region22: #{tpu_custom_call.1} parent=5 // pred_check_branch
        %189 = sbr.rel (%p187) target = $region24
      $region23: #{tpu_custom_call.1} parent=5 // pred_region
        // Predicated region
        $region25: #{tpu_custom_call.1} parent=23 // pred_check
          %p190 = pneg %p51
        $region26: #{tpu_custom_call.1} parent=23 // pred_check_branch
          %192 = sbr.rel (%p190) target = $region28
        $region27: #{tpu_custom_call.1} parent=23 // pred_region
          %s193 = sand.u32 %s41, 1
          %s194 = scalar_lea.sflag [#allocation3], %s193
          %s195 = sand.u32 %s41, 1
          %s196 = smul.addr %s195, 16
          %s197 = scalar_lea.vmem [#allocation2], %s196
          %s199 = ssub.s32 256, 256
          %200 = vsyncadd %s194, %s199
          %s201 = smul.addr %s26, 2
          %s202 = smul.addr %s201, 128
          %s203 = scalar_lea.hbm %s0, %s202
          %s204 = sshll.u32 %s197, 4
          %s205 = int_to_ptr.vmem [resolvable:$true] %s204
          %210 = dma.hbm_to_vmem [thread:$0]  %s203, 256, %s205, %s194, 128, 128, 8
        $region28: #{tpu_custom_call.1} parent=23 // pred_fallthru
          _
        // Predicated region
        $region29: #{tpu_custom_call.1} parent=23 // pred_check
          %p211 = pneg %p79
        $region30: #{tpu_custom_call.1} parent=23 // pred_check_branch
          %213 = sbr.rel (%p211) target = $region32
        $region31: #{tpu_custom_call.1} parent=23 // pred_region
          %s214 = sand.u32 %s19, 1
          %s215 = scalar_lea.sflag [#allocation6], %s214
          %s216 = sand.u32 %s69, 1
          %s217 = smul.addr %s216, 16
          %s218 = scalar_lea.vmem [#allocation5], %s217
          %s219 = smul.u32 2, %s27
          %s221 = ssub.s32 256, 256
          %222 = vsyncadd %s215, %s221
          %s223 = smul.addr %s26, 2
          %s224 = sadd.s32 %s219, %s223
          %s225 = smul.addr %s224, 128
          %s226 = scalar_lea.hbm %s1, %s225
          %s227 = sshll.u32 %s218, 4
          %s228 = int_to_ptr.vmem [resolvable:$true] %s227
          %233 = dma.hbm_to_vmem [thread:$0]  %s226, 256, %s228, %s215, 128, 128, 8
        $region32: #{tpu_custom_call.1} parent=23 // pred_fallthru
          _
      $region24: #{tpu_custom_call.1} parent=5 // pred_fallthru
        _
      %p234 = scmp.le.s32.totalorder 1, %s19
      %p235 = scmp.lt.s32.totalorder %s19, 3
      %p236 = pnand %p234, %p235
      %p237 = pneg %p236
      // Predicated region
      $region33: #{tpu_custom_call.1} parent=5 // pred_check
        _
      $region34: #{tpu_custom_call.1} parent=5 // pred_check_branch
        %239 = sbr.rel (%p236) target = $region36
      $region35: #{tpu_custom_call.1} parent=5 // pred_region
        %s240 = ssub.s32 %s19, 1
        %s241 = sand.u32 %s44, 1
        %s242 = scalar_lea.sflag [#allocation3], %s241
        %s243 = sand.u32 %s44, 1
        %s244 = smul.addr %s243, 16
        %s245 = scalar_lea.vmem [#allocation2], %s244
        // Predicated region
        $region37: #{tpu_custom_call.1} parent=35 // pred_check
          %p246 = pneg %p57
        $region38: #{tpu_custom_call.1} parent=35 // pred_check_branch
          %248 = sbr.rel (%p246) target = $region40
        $region39: #{tpu_custom_call.1} parent=35 // pred_region
          %249 = dma.done %s242, 256
        $region40: #{tpu_custom_call.1} parent=35 // pred_fallthru
          _
        %s250 = sand.u32 %s24, 1
        %s251 = scalar_lea.sflag [#allocation6], %s250
        %s252 = sand.u32 %s72, 1
        %s253 = smul.addr %s252, 16
        %s254 = scalar_lea.vmem [#allocation5], %s253
        // Predicated region
        $region41: #{tpu_custom_call.1} parent=35 // pred_check
          %p255 = pneg %p85
        $region42: #{tpu_custom_call.1} parent=35 // pred_check_branch
          %257 = sbr.rel (%p255) target = $region44
        $region43: #{tpu_custom_call.1} parent=35 // pred_region
          %258 = dma.done %s251, 256
        $region44: #{tpu_custom_call.1} parent=35 // pred_fallthru
          _
        // Predicated region
        $region45: #{tpu_custom_call.1} parent=35 // pred_check
          %p259 = pneg %p106
        $region46: #{tpu_custom_call.1} parent=35 // pred_check_branch
          %261 = sbr.rel (%p259) target = $region48
        $region47: #{tpu_custom_call.1} parent=35 // pred_region
          %262 = dma.done [#allocation6], 512
        $region48: #{tpu_custom_call.1} parent=35 // pred_fallthru
          _
        %s263 = sand.u32 %s44, 1
        %s264 = scalar_lea.sflag [#allocation3], %s263
        %s265 = sand.u32 %s44, 1
        %s266 = smul.addr %s265, 16
        %s267 = scalar_lea.vmem [#allocation2], %s266
        %p268 = pneg %p57
        %p269 = pneg %p54
        %s270 = sand.u32 %s24, 1
        %s271 = scalar_lea.sflag [#allocation6], %s270
        %s272 = sand.u32 %s72, 1
        %s273 = smul.addr %s272, 16
        %s274 = scalar_lea.vmem [#allocation5], %s273
        %p275 = pneg %p85
        %p276 = pneg %p82
        %p277 = pneg %p106
        %p278 = pneg %p103
        %p279 = pneg %p127
        %p280 = pneg %p124
        %p281 = pneg %p155
        %p282 = pneg %p152
        %s283 = sand.u32 %s142, 1
        %s284 = scalar_lea.sflag [#allocation4], %s283
        %s285 = sand.u32 %s142, 1
        %s286 = smul.addr %s285, 16
        %s287 = scalar_lea.vmem [#allocation8], %s286
        %s288 = smul.u32 2, %s29
        %s289 = smul.u32 2, %s29
        %v290 = vld [vmem:[%s245] sm:$0xff]
        %v291 = vld [vmem:[%s245 + $0x8] sm:$0xff]
        %v292 = vld [vmem:[%s254] sm:$0xff]
        %v293 = vld [vmem:[%s254 + $0x8] sm:$0xff]
        %vm294 = vcmask 130048
        %v296 = vsel %vm294, %v292, 0
        %v299 = vsel %vm294, %v293, 0
        %301 = vmatprep.subr.mxu0 0.0
        %302 = vmatpush1.msra.mxu0 %v290
        %303 = vmatprep.subr.mxu0 0.0
        %304 = vmatpush1.msra.mxu0 %v291
        %305 = vmatprep.subr.mxu0 0.0
        %306 = vmatpush1.msra.mxu0 0.0
        %307 = vmatprep.subr.mxu0 0.0
        %308 = vmatpush1.msra.mxu0 0.0
        %309 = vmatprep.subr.mxu0 0.0
        %310 = vmatpush1.msra.mxu0 0.0
        %311 = vmatprep.subr.mxu0 0.0
        %312 = vmatpush1.msra.mxu0 0.0
        %313 = vmatprep.subr.mxu0 0.0
        %314 = vmatpush1.msra.mxu0 0.0
        %315 = vmatprep.subr.mxu0 0.0
        %316 = vmatpush1.msra.mxu0 0.0
        %317 = vmatprep.subr.mxu0 0.0
        %318 = vmatpush1.msra.mxu0 0.0
        %319 = vmatprep.subr.mxu0 0.0
        %320 = vmatpush1.msra.mxu0 0.0
        %321 = vmatprep.subr.mxu0 0.0
        %322 = vmatpush1.msra.mxu0 0.0
        %323 = vmatprep.subr.mxu0 0.0
        %324 = vmatpush1.msra.mxu0 0.0
        %325 = vmatprep.subr.mxu0 0.0
        %326 = vmatpush1.msra.mxu0 0.0
        %327 = vmatprep.subr.mxu0 0.0
        %328 = vmatpush1.msra.mxu0 0.0
        %329 = vmatprep.subr.mxu0 0.0
        %330 = vmatpush1.msra.mxu0 0.0
        %331 = vmatprep.subr.mxu0 0.0
        %332 = vmatpush1.msra.mxu0 0.0
        %333 = vmatprep.subr.mxu0 0.0
        %334 = vmatpush1.msra.mxu0 0.0
        %335 = vmatprep.subr.mxu0 0.0
        %336 = vmatpush1.msra.mxu0 0.0
        %337 = vmatprep.subr.mxu0 0.0
        %338 = vmatpush1.msra.mxu0 0.0
        %339 = vmatprep.subr.mxu0 0.0
        %340 = vmatpush1.msra.mxu0 0.0
        %341 = vmatprep.subr.mxu0 0.0
        %342 = vmatpush1.msra.mxu0 0.0
        %343 = vmatprep.subr.mxu0 0.0
        %344 = vmatpush1.msra.mxu0 0.0
        %345 = vmatprep.subr.mxu0 0.0
        %346 = vmatpush1.msra.mxu0 0.0
        %347 = vmatprep.subr.mxu0 0.0
        %348 = vmatpush1.msra.mxu0 0.0
        %349 = vmatprep.subr.mxu0 0.0
        %350 = vmatpush1.msra.mxu0 0.0
        %351 = vmatprep.subr.mxu0 0.0
        %352 = vmatpush1.msra.mxu0 0.0
        %353 = vmatprep.subr.mxu0 0.0
        %354 = vmatpush1.msra.mxu0 0.0
        %355 = vmatprep.subr.mxu0 0.0
        %356 = vmatpush1.msra.mxu0 0.0
        %357 = vmatprep.subr.mxu0 0.0
        %358 = vmatpush1.msra.mxu0 0.0
        %359 = vmatprep.subr.mxu0 0.0
        %360 = vmatpush1.msra.mxu0 0.0
        %361 = vmatprep.subr.mxu0 0.0
        %362 = vmatpush1.msra.mxu0 0.0
        %363 = vmatprep.subr.mxu0 0.0
        %364 = vmatpush1.msra.mxu0 0.0
        %365 = vmatprep.mubr.f32.mxu0 0.0
        %366 = vmatmul.mubr.f32.gmra.mrb[0].mxu0 %v296
        %v367 = vpop.f32.mrb[0].mxu0
        %v368 = vadd.f32 0.0, %v367
        %v369 = vpop.f32.mrb[0].mxu0
        %370 = vmatprep.mubr.f32.mxu0 0.0
        %371 = vmatmul.mubr.f32.gmra.mrb[0].mxu0 %v299
        %v372 = vpop.f32.mrb[0].mxu0
        %v373 = vadd.f32 0.0, %v372
        %v374 = vpop.f32.mrb[0].mxu0
        %375 = vdwg.mxu0
        %v376 = vld [vmem:[#allocation7] sm:$0xff]
        %v377 = vld [vmem:[#allocation7 + $0x8] sm:$0xff]
        %v378 = vld [vmem:[#allocation7 + $0x10] sm:$0xff]
        %v379 = vld [vmem:[#allocation7 + $0x18] sm:$0xff]
        %v380 = vld [vmem:[%s3] sm:$0x1]
        %v382 = vlaneseq
        %v383 = vshrl.u32 %v382, 7
        %v384 = vsub.s32 0, %v383
        %v385 = vrot.slane %v380, %v384
        %vm387 = vcmask 261120
        %v389 = vsel %vm387, %v368, 0
        %v392 = vsel %vm387, %v373, 0
        %394 = vmatprep.subr.mxu0 0.0
        %395 = vmatpush1.msra.mxu0 %v376
        %396 = vmatprep.subr.mxu0 0.0
        %397 = vmatpush1.msra.mxu0 %v377
        %398 = vmatprep.subr.mxu0 0.0
        %399 = vmatpush1.msra.mxu0 %v378
        %400 = vmatprep.subr.mxu0 0.0
        %401 = vmatpush1.msra.mxu0 %v379
        %402 = vmatprep.subr.mxu0 0.0
        %403 = vmatpush1.msra.mxu0 0.0
        %404 = vmatprep.subr.mxu0 0.0
        %405 = vmatpush1.msra.mxu0 0.0
        %406 = vmatprep.subr.mxu0 0.0
        %407 = vmatpush1.msra.mxu0 0.0
        %408 = vmatprep.subr.mxu0 0.0
        %409 = vmatpush1.msra.mxu0 0.0
        %410 = vmatprep.subr.mxu0 0.0
        %411 = vmatpush1.msra.mxu0 0.0
        %412 = vmatprep.subr.mxu0 0.0
        %413 = vmatpush1.msra.mxu0 0.0
        %414 = vmatprep.subr.mxu0 0.0
        %415 = vmatpush1.msra.mxu0 0.0
        %416 = vmatprep.subr.mxu0 0.0
        %417 = vmatpush1.msra.mxu0 0.0
        %418 = vmatprep.subr.mxu0 0.0
        %419 = vmatpush1.msra.mxu0 0.0
        %420 = vmatprep.subr.mxu0 0.0
        %421 = vmatpush1.msra.mxu0 0.0
        %422 = vmatprep.subr.mxu0 0.0
        %423 = vmatpush1.msra.mxu0 0.0
        %424 = vmatprep.subr.mxu0 0.0
        %425 = vmatpush1.msra.mxu0 0.0
        %426 = vmatprep.subr.mxu0 0.0
        %427 = vmatpush1.msra.mxu0 0.0
        %428 = vmatprep.subr.mxu0 0.0
        %429 = vmatpush1.msra.mxu0 0.0
        %430 = vmatprep.subr.mxu0 0.0
        %431 = vmatpush1.msra.mxu0 0.0
        %432 = vmatprep.subr.mxu0 0.0
        %433 = vmatpush1.msra.mxu0 0.0
        %434 = vmatprep.subr.mxu0 0.0
        %435 = vmatpush1.msra.mxu0 0.0
        %436 = vmatprep.subr.mxu0 0.0
        %437 = vmatpush1.msra.mxu0 0.0
        %438 = vmatprep.subr.mxu0 0.0
        %439 = vmatpush1.msra.mxu0 0.0
        %440 = vmatprep.subr.mxu0 0.0
        %441 = vmatpush1.msra.mxu0 0.0
        %442 = vmatprep.subr.mxu0 0.0
        %443 = vmatpush1.msra.mxu0 0.0
        %444 = vmatprep.subr.mxu0 0.0
        %445 = vmatpush1.msra.mxu0 0.0
        %446 = vmatprep.subr.mxu0 0.0
        %447 = vmatpush1.msra.mxu0 0.0
        %448 = vmatprep.subr.mxu0 0.0
        %449 = vmatpush1.msra.mxu0 0.0
        %450 = vmatprep.subr.mxu0 0.0
        %451 = vmatpush1.msra.mxu0 0.0
        %452 = vmatprep.subr.mxu0 0.0
        %453 = vmatpush1.msra.mxu0 0.0
        %454 = vmatprep.subr.mxu0 0.0
        %455 = vmatpush1.msra.mxu0 0.0
        %456 = vmatprep.subr.mxu0 0.0
        %457 = vmatpush1.msra.mxu0 0.0
        %458 = vmatprep.mubr.f32.mxu0 0.0
        %459 = vmatmul.mubr.f32.gmra.mrb[0].mxu0 %v389
        %v460 = vpop.f32.mrb[0].mxu0
        %v461 = vadd.f32 %v385, %v460
        %v462 = vpop.f32.mrb[0].mxu0
        %463 = vmatprep.mubr.f32.mxu0 0.0
        %464 = vmatmul.mubr.f32.gmra.mrb[0].mxu0 %v392
        %v465 = vpop.f32.mrb[0].mxu0
        %v466 = vadd.f32 %v385, %v465
        %v467 = vpop.f32.mrb[0].mxu0
        %468 = vdwg.mxu0
        %469 = vst [vmem:[%s287] sm:$0xff] %v461
        %470 = vst [vmem:[%s287 + $0x8] sm:$0xff] %v466
        %s471 = sand.u32 %s142, 1
        %s472 = scalar_lea.sflag [#allocation4], %s471
        %s473 = sand.u32 %s142, 1
        %s474 = smul.addr %s473, 16
        %s475 = scalar_lea.vmem [#allocation8], %s474
        // Predicated region
        $region49: #{tpu_custom_call.1} parent=35 // pred_check
          %p476 = pneg %p152
        $region50: #{tpu_custom_call.1} parent=35 // pred_check_branch
          %478 = sbr.rel (%p476) target = $region52
        $region51: #{tpu_custom_call.1} parent=35 // pred_region
          %s479 = smul.u32 2, %s29
          %s481 = ssub.s32 256, 256
          %482 = vsyncadd %s472, %s481
          %s483 = smul.addr %s28, 2
          %s484 = sadd.s32 %s479, %s483
          %s485 = smul.addr %s484, 128
          %s486 = scalar_lea.hbm %s4, %s485
          %s487 = sshll.u32 %s475, 4
          %s488 = int_to_ptr.vmem [resolvable:$true] %s487
          %493 = dma.vmem_to_hbm [thread:$0]  %s488, 256, %s486, %s472, 128, 128, 8
        $region52: #{tpu_custom_call.1} parent=35 // pred_fallthru
          _
      $region36: #{tpu_custom_call.1} parent=5 // pred_fallthru
        _
      %p494 = scmp.le.s32.totalorder 2, %s19
      // Predicated region
      $region53: #{tpu_custom_call.1} parent=5 // pred_check
        %p495 = pneg %p494
      $region54: #{tpu_custom_call.1} parent=5 // pred_check_branch
        %497 = sbr.rel (%p495) target = $region56
      $region55: #{tpu_custom_call.1} parent=5 // pred_region
        %s498 = ssub.s32 %s19, 2
        // Predicated region
        $region57: #{tpu_custom_call.1} parent=55 // pred_check
          %p499 = pneg %p158
        $region58: #{tpu_custom_call.1} parent=55 // pred_check_branch
          %501 = sbr.rel (%p499) target = $region60
        $region59: #{tpu_custom_call.1} parent=55 // pred_region
          %s502 = sand.u32 %s143, 1
          %s503 = scalar_lea.sflag [#allocation4], %s502
          %s504 = sand.u32 %s143, 1
          %s505 = smul.addr %s504, 16
          %s506 = scalar_lea.vmem [#allocation8], %s505
          %507 = dma.done %s503, 256
        $region60: #{tpu_custom_call.1} parent=55 // pred_fallthru
          _
      $region56: #{tpu_custom_call.1} parent=5 // pred_fallthru
        _
    $region6: #{tpu_custom_call.1} parent=1 // loop_footer
      %s23 = sadd.s32 1, %s19
    $region7: #{tpu_custom_call.1} parent=1 // loop_footer_branch
      %18 = sbr.rel target = $region3
    $region8: #{tpu_custom_call.1} parent=1 // loop_exit
      _
    %508 = vsyncpa [#allocation3], 1
    %s509 = scalar_lea.sflag [#allocation3], 1
    %510 = vsyncpa %s509, 1
    %511 = vsyncpa [#allocation6], 1
    %s512 = scalar_lea.sflag [#allocation6], 1
    %513 = vsyncpa %s512, 1
    %514 = vsyncpa [#allocation4], 1
    %s515 = scalar_lea.sflag [#allocation4], 1
    %516 = vsyncpa %s515, 1

</llo_original>
